<compile_context>
chip_gen: v5e
topology: v5e:2x2
jax: 0.10.0
libtpu: 0.0.40
codegen_flags: <defaults>
</compile_context>

<pallas_src>
import functools

import jax
import jax.numpy as jnp
from jax import lax
from jax.experimental import pallas as pl
from jax.experimental.pallas import tpu as pltpu


def _sobelxy_kernel(x_ref, o_ref, *, H, W):
    # x_ref / o_ref: (bc, H*W) — bc whole images per block, row-major flattened
    # spatial dims on the lane axis.
    bc, HW = x_ref.shape
    x = x_ref[...].astype(jnp.float32)

    # Flat spatial index per image (resets every sublane row / image).
    flat = lax.broadcasted_iota(jnp.int32, (bc, HW), 1)

    # Vertical neighbours: x(h-1, w) / x(h+1, w) with the zero halo of
    # Conv2d(padding=1) applied via masking (no padded scratch copy).
    up = jnp.where(flat >= W, pltpu.roll(x, W % HW, axis=1), 0.0)
    down = jnp.where(flat < HW - W, pltpu.roll(x, (HW - W) % HW, axis=1), 0.0)

    # Separable Sobel (cross-correlation orientation, matches PyTorch Conv2d):
    #   convx = col [1,2,1] (x) row [1,0,-1]
    #   convy = col [1,0,-1] (x) row [1,2,1]
    a = up + 2.0 * x + down        # vertical [1, 2, 1]
    b = up - down                  # vertical [1, 0, -1]

    # Column-within-row index for the horizontal edge masks.
    if (W & (W - 1)) == 0:
        wpos = jnp.bitwise_and(flat, W - 1)
    else:
        wpos = jnp.remainder(flat, W)
    not_first_col = wpos != 0
    not_last_col = wpos != (W - 1)

    # Horizontal neighbours via lane rolls (XLU) + edge masks.
    a_l = jnp.where(not_first_col, pltpu.roll(a, 1 % HW, axis=1), 0.0)
    a_r = jnp.where(not_last_col, pltpu.roll(a, (HW - 1) % HW, axis=1), 0.0)
    b_l = jnp.where(not_first_col, pltpu.roll(b, 1 % HW, axis=1), 0.0)
    b_r = jnp.where(not_last_col, pltpu.roll(b, (HW - 1) % HW, axis=1), 0.0)

    gx = a_l - a_r                 # convx output
    gy = b_l + 2.0 * b + b_r       # convy output

    o_ref[...] = (jnp.abs(gx) + jnp.abs(gy)).astype(o_ref.dtype)


def _vmem_budget():
    """(block byte target, vmem_limit_bytes) chosen per TPU generation."""
    cap = None
    try:
        info = pltpu.get_tpu_info()
        for name in ("vmem_capacity_bytes", "vmem_size_bytes", "vmem_bytes"):
            v = getattr(info, name, None)
            if v:
                cap = int(v)
                break
    except Exception:
        cap = None
    if cap is None:
        cap = 64 * 1024 * 1024                 # conservative (v7x-sized)
    if cap >= (128 << 20):                     # v5e / v6e: headroom to spare
        return (6 << 20), (64 << 20)
    return (2 << 20), (32 << 20)               # v7x / unknown


def _choose_nc_tile(NC, HW, itemsize, target_bytes):
    """Images per block: whole N*C if it fits the byte target, otherwise the
    largest multiple-of-8 divisor of N*C that fits (keeps the sublane dim a
    valid block size)."""
    if NC * HW * itemsize <= target_bytes:
        return NC
    best = None
    for bc in range(8, NC + 1, 8):
        if NC % bc == 0 and bc * HW * itemsize <= target_bytes:
            best = bc
    if best is not None:
        return best
    for bc in range(8, NC + 1, 8):
        if NC % bc == 0:
            return bc
    return NC


def sobelxy(x):
    """x: (N, C, H, W), same layout as the PyTorch module. Returns (N, C, H, W)."""
    N, C, H, W = x.shape
    NC, HW = N * C, H * W
    x2 = x.reshape(NC, HW)                     # free: contiguous dim merge only

    itemsize = jnp.dtype(x.dtype).itemsize
    target_bytes, vmem_limit = _vmem_budget()
    bc = _choose_nc_tile(NC, HW, itemsize, target_bytes)
    grid = (NC // bc,)

    kernel = functools.partial(_sobelxy_kernel, H=H, W=W)

    out = pl.pallas_call(
        kernel,
        out_shape=jax.ShapeDtypeStruct((NC, HW), x.dtype),
        grid_spec=pltpu.PrefetchScalarGridSpec(
            num_scalar_prefetch=0,
            grid=grid,
            in_specs=[pl.BlockSpec((bc, HW), lambda i: (i, 0))],
            out_specs=pl.BlockSpec((bc, HW), lambda i: (i, 0)),
        ),
        compiler_params=pltpu.CompilerParams(
            dimension_semantics=("parallel",),
            vmem_limit_bytes=vmem_limit,
        ),
    )(x2)
    return out.reshape(N, C, H, W)             # free: contiguous dim split only


def _reference(x):
    """Pure-JAX reference using lax depthwise conv (matches the PyTorch module)."""
    N, C, H, W = x.shape
    sobel = jnp.array([[1.0, 0.0, -1.0],
                       [2.0, 0.0, -2.0],
                       [1.0, 0.0, -1.0]], dtype=x.dtype)
    wx = jnp.broadcast_to(sobel, (C, 1, 3, 3))          # (O, I/groups, kH, kW)
    wy = jnp.broadcast_to(sobel.T, (C, 1, 3, 3))
    dn = lax.conv_dimension_numbers(x.shape, wx.shape, ("NCHW", "OIHW", "NCHW"))
    convx = lax.conv_general_dilated(x, wx, (1, 1), ((1, 1), (1, 1)),
                                     dimension_numbers=dn, feature_group_count=C)
    convy = lax.conv_general_dilated(x, wy, (1, 1), ((1, 1), (1, 1)),
                                     dimension_numbers=dn, feature_group_count=C)
    return jnp.abs(convx) + jnp.abs(convy)


if __name__ == "__main__":
    key = jax.random.PRNGKey(0)
    N, C, H, W = 2, 4, 16, 16
    x = jax.random.normal(key, (N, C, H, W), dtype=jnp.float32)

    out = jax.block_until_ready(sobelxy(x))
    ref = jax.block_until_ready(_reference(x))

    assert out.shape == (N, C, H, W)
    assert jnp.allclose(out, ref, atol=1e-4, rtol=1e-5), "mismatch vs reference"
    print("KERNEL_OK")
</pallas_src>

<mosaic_0001>
module attributes {stable_mosaic.version = 11 : i64} {
  func.func @_sobelxy_kernel(%arg0: i32, %arg1: memref<8x256xf32, #tpu.memory_space<vmem>>, %arg2: memref<8x256xf32, #tpu.memory_space<vmem>>) attributes {dimension_semantics = [#tpu.dimension_semantics<parallel>], iteration_bounds = array<i64: 1>, scalar_prefetch = 0 : i64, scratch_operands = 0 : i64, tpu.core_type = #tpu.core_type<tc>, window_params = [{transform_indices = @transform_0, window_bounds = array<i64: 8, 256>}, {transform_indices = @transform_1, window_bounds = array<i64: 8, 256>}]} {
    %c0 = arith.constant 0 : index
    %c0_0 = arith.constant 0 : index
    %0 = vector.load %arg1[%c0, %c0_0] : memref<8x256xf32, #tpu.memory_space<vmem>>, vector<8x256xf32>
    %1 = tpu.iota {dimensions = array<i32: 1>} : vector<8x256xi32>
    %c16_i32 = arith.constant 16 : i32
    %2 = vector.broadcast %c16_i32 : i32 to vector<8x256xi32>
    %3 = arith.cmpi sge, %1, %2 : vector<8x256xi32>
    %c16_i32_1 = arith.constant 16 : i32
    %4 = tpu.dynamic_rotate %0 by %c16_i32_1 dim 1 : vector<8x256xf32>, i32 -> vector<8x256xf32>
    %cst = arith.constant 0.000000e+00 : f32
    %5 = vector.broadcast %cst : f32 to vector<8x256xf32>
    %6 = arith.select %3, %4, %5 : vector<8x256xi1>, vector<8x256xf32>
    %c240_i32 = arith.constant 240 : i32
    %7 = vector.broadcast %c240_i32 : i32 to vector<8x256xi32>
    %8 = arith.cmpi slt, %1, %7 : vector<8x256xi32>
    %c240_i32_2 = arith.constant 240 : i32
    %9 = tpu.dynamic_rotate %0 by %c240_i32_2 dim 1 : vector<8x256xf32>, i32 -> vector<8x256xf32>
    %cst_3 = arith.constant 0.000000e+00 : f32
    %10 = vector.broadcast %cst_3 : f32 to vector<8x256xf32>
    %11 = arith.select %8, %9, %10 : vector<8x256xi1>, vector<8x256xf32>
    %cst_4 = arith.constant 2.000000e+00 : f32
    %12 = vector.broadcast %cst_4 : f32 to vector<8x256xf32>
    %13 = arith.mulf %12, %0 : vector<8x256xf32>
    %14 = arith.addf %6, %13 : vector<8x256xf32>
    %15 = arith.addf %14, %11 : vector<8x256xf32>
    %16 = arith.subf %6, %11 : vector<8x256xf32>
    %c15_i32 = arith.constant 15 : i32
    %17 = vector.broadcast %c15_i32 : i32 to vector<8x256xi32>
    %18 = arith.andi %1, %17 : vector<8x256xi32>
    %c0_i32 = arith.constant 0 : i32
    %19 = vector.broadcast %c0_i32 : i32 to vector<8x256xi32>
    %20 = arith.cmpi ne, %18, %19 : vector<8x256xi32>
    %c15_i32_5 = arith.constant 15 : i32
    %21 = vector.broadcast %c15_i32_5 : i32 to vector<8x256xi32>
    %22 = arith.cmpi ne, %18, %21 : vector<8x256xi32>
    %c1_i32 = arith.constant 1 : i32
    %23 = tpu.dynamic_rotate %15 by %c1_i32 dim 1 : vector<8x256xf32>, i32 -> vector<8x256xf32>
    %cst_6 = arith.constant 0.000000e+00 : f32
    %24 = vector.broadcast %cst_6 : f32 to vector<8x256xf32>
    %25 = arith.select %20, %23, %24 : vector<8x256xi1>, vector<8x256xf32>
    %c255_i32 = arith.constant 255 : i32
    %26 = tpu.dynamic_rotate %15 by %c255_i32 dim 1 : vector<8x256xf32>, i32 -> vector<8x256xf32>
    %cst_7 = arith.constant 0.000000e+00 : f32
    %27 = vector.broadcast %cst_7 : f32 to vector<8x256xf32>
    %28 = arith.select %22, %26, %27 : vector<8x256xi1>, vector<8x256xf32>
    %c1_i32_8 = arith.constant 1 : i32
    %29 = tpu.dynamic_rotate %16 by %c1_i32_8 dim 1 : vector<8x256xf32>, i32 -> vector<8x256xf32>
    %cst_9 = arith.constant 0.000000e+00 : f32
    %30 = vector.broadcast %cst_9 : f32 to vector<8x256xf32>
    %31 = arith.select %20, %29, %30 : vector<8x256xi1>, vector<8x256xf32>
    %c255_i32_10 = arith.constant 255 : i32
    %32 = tpu.dynamic_rotate %16 by %c255_i32_10 dim 1 : vector<8x256xf32>, i32 -> vector<8x256xf32>
    %cst_11 = arith.constant 0.000000e+00 : f32
    %33 = vector.broadcast %cst_11 : f32 to vector<8x256xf32>
    %34 = arith.select %22, %32, %33 : vector<8x256xi1>, vector<8x256xf32>
    %35 = arith.subf %25, %28 : vector<8x256xf32>
    %cst_12 = arith.constant 2.000000e+00 : f32
    %36 = vector.broadcast %cst_12 : f32 to vector<8x256xf32>
    %37 = arith.mulf %36, %16 : vector<8x256xf32>
    %38 = arith.addf %31, %37 : vector<8x256xf32>
    %39 = arith.addf %38, %34 : vector<8x256xf32>
    %40 = math.absf %35 : vector<8x256xf32>
    %41 = math.absf %39 : vector<8x256xf32>
    %42 = arith.addf %40, %41 : vector<8x256xf32>
    %c0_13 = arith.constant 0 : index
    %c0_14 = arith.constant 0 : index
    %43 = vector.load %arg2[%c0_13, %c0_14] : memref<8x256xf32, #tpu.memory_space<vmem>>, vector<8x256xf32>
    tpu.vector_store %arg2[%c0_13, %c0_14], %42 {strides = array<i32>} : memref<8x256xf32, #tpu.memory_space<vmem>>, vector<8x256xf32>,
    return
  }
  func.func @transform_0(%arg0: i32) -> (i32, i32) {
    %c0_i32 = arith.constant 0 : i32
    %c0_i32_0 = arith.constant 0 : i32
    return %arg0, %c0_i32 : i32, i32
  }
  func.func @transform_1(%arg0: i32) -> (i32, i32) {
    %c0_i32 = arith.constant 0 : i32
    %c0_i32_0 = arith.constant 0 : i32
    return %arg0, %c0_i32 : i32, i32
  }
}

</mosaic_0001>

<llo_original>
// kernel: tpu_custom_call.1
$region0: #{tpu_custom_call.1}
  #allocation0 [shape = 'u32[]', space=smem, size = 0x4, offset = 0x4, fixed_abs, tag = 'smem constant byte address 0x4 - core index']
  #allocation1 [shape = 'u32[72,128]{1,0:T(1,128)}', space=vmem, size = 0x9000, scoped, tag = 'internal scratch']
  %s0 = inlined_call_operand.hbm [shape: f32[8,256], index: 0, kind: input, shape index: {}]
  %s1 = inlined_call_operand.hbm [shape: f32[8,256], index: 1, kind: output, shape index: {}]
  %s2 = sld [smem:[#allocation0]]
  $region18: #{tpu_custom_call.1} parent=0
    _
  %s4 = ssub.s32 1, %s2
  %s5 = scalar_select 0, %s4, %s2
  $region1: #{tpu_custom_call.1} parent=0
    #allocation2 [shape = 'u8[8192]{0}', space=vmem, size = 0x2000, scoped, tag = 'input window, operand 0, single buffered']
    #allocation3 [shape = 's32[1]{0}', space=sflag, size = 0x4, scoped, tag = 'scoped memory for tpu_custom_call.1']
    #allocation4 [shape = 's32[1]{0}', space=sflag, size = 0x4, scoped, tag = 'scoped memory for tpu_custom_call.1']
    #allocation5 [shape = 'u8[8192]{0}', space=vmem, size = 0x2000, scoped, tag = 'output window, operand 0, single buffered']
    %6 = vsyncpa [#allocation3], 0
    %7 = vsyncpa [#allocation4], 0
    // Predicated region
    $region2: #{tpu_custom_call.1} parent=1 // pred_check
      _
    $region3: #{tpu_custom_call.1} parent=1 // pred_check_branch
      %9 = sbr.rel (0) target = $region5
    $region4: #{tpu_custom_call.1} parent=1 // pred_region
      %11 = vsyncadd [#allocation3], 0
      %s13 = sshll.u32 %s0, 4
      %s14 = int_to_ptr.hbm [resolvable:$true] %s13
      %s15 = sshll.u32 [#allocation2], 4
      %s16 = int_to_ptr.vmem [resolvable:$true] %s15
      %18 = dma.hbm_to_vmem [thread:$0]  %s14, 256, %s16, [#allocation3]
    $region5: #{tpu_custom_call.1} parent=1 // pred_fallthru
      _
    // Predicated region
    $region6: #{tpu_custom_call.1} parent=1 // pred_check
      _
    $region7: #{tpu_custom_call.1} parent=1 // pred_check_branch
      %20 = sbr.rel (0) target = $region9
    $region8: #{tpu_custom_call.1} parent=1 // pred_region
      %22 = dma.done [#allocation3], 256
    $region9: #{tpu_custom_call.1} parent=1 // pred_fallthru
      _
    %v23 = vld [vmem:[#allocation2] sm:$0xff]
    %v24 = vld [vmem:[#allocation2 + $0x8] sm:$0xff]
    %v25 = vlaneseq
    %v26 = vand.u32 %v25, 127
    %v27 = vadd.s32 %v26, 128
    %vm28 = vcmp.ge.s32.totalorder %v26, 16
    %vm29 = vcmp.ge.s32.totalorder %v27, 16
    %30 = vrot.lane.b32.xlu0 %v23, 16
    %v31 = vpop.permute.xlu0 %30
    %32 = vrot.lane.b32.xlu0 %v24, 16
    %v33 = vpop.permute.xlu0 %32
    %vm34 = vcmp.lt.s32.totalorder %v26, 16
    %v35 = vsel %vm34, %v31, %v33
    %v36 = vsel %vm34, %v33, %v31
    %v37 = vsel %vm28, %v36, 0.0
    %v38 = vsel %vm29, %v35, 0.0
    %vm39 = vcmp.lt.s32.totalorder %v26, 240
    %vm40 = vcmp.lt.s32.totalorder %v27, 240
    %41 = vrot.lane.b32.xlu0 %v23, 112
    %v42 = vpop.permute.xlu0 %41
    %43 = vrot.lane.b32.xlu0 %v24, 112
    %v44 = vpop.permute.xlu0 %43
    %vm45 = vcmp.lt.s32.totalorder %v26, 112
    %v46 = vsel %vm45, %v42, %v44
    %v47 = vsel %vm45, %v44, %v42
    %v48 = vsel %vm39, %v46, 0.0
    %v49 = vsel %vm40, %v47, 0.0
    %v50 = vmul.f32 %v23, 2.0
    %v51 = vmul.f32 %v24, 2.0
    %v52 = vadd.f32 %v37, %v50
    %v53 = vadd.f32 %v38, %v51
    %v54 = vadd.f32 %v52, %v48
    %v55 = vadd.f32 %v53, %v49
    %v56 = vsub.f32 %v37, %v48
    %v57 = vsub.f32 %v38, %v49
    %v58 = vand.u32 %v26, 15
    %v59 = vand.u32 %v27, 15
    %vm60 = vcmp.ne.s32.totalorder %v58, 0
    %vm61 = vcmp.ne.s32.totalorder %v59, 0
    %vm62 = vcmp.ne.s32.totalorder %v58, 15
    %vm63 = vcmp.ne.s32.totalorder %v59, 15
    %64 = vrot.lane.b32.xlu0 %v54, 1
    %v65 = vpop.permute.xlu0 %64
    %66 = vrot.lane.b32.xlu0 %v55, 1
    %v67 = vpop.permute.xlu0 %66
    %vm68 = vcmp.lt.s32.totalorder %v26, 1
    %v69 = vsel %vm68, %v65, %v67
    %v70 = vsel %vm68, %v67, %v65
    %v71 = vsel %vm60, %v70, 0.0
    %v72 = vsel %vm61, %v69, 0.0
    %73 = vrot.lane.b32.xlu0 %v54, 127
    %v74 = vpop.permute.xlu0 %73
    %75 = vrot.lane.b32.xlu0 %v55, 127
    %v76 = vpop.permute.xlu0 %75
    %vm77 = vcmp.lt.s32.totalorder %v26, 127
    %v78 = vsel %vm77, %v74, %v76
    %v79 = vsel %vm77, %v76, %v74
    %v80 = vsel %vm62, %v78, 0.0
    %v81 = vsel %vm63, %v79, 0.0
    %82 = vrot.lane.b32.xlu0 %v56, 1
    %v83 = vpop.permute.xlu0 %82
    %84 = vrot.lane.b32.xlu0 %v57, 1
    %v85 = vpop.permute.xlu0 %84
    %v86 = vsel %vm68, %v83, %v85
    %v87 = vsel %vm68, %v85, %v83
    %v88 = vsel %vm60, %v87, 0.0
    %v89 = vsel %vm61, %v86, 0.0
    %90 = vrot.lane.b32.xlu0 %v56, 127
    %v91 = vpop.permute.xlu0 %90
    %92 = vrot.lane.b32.xlu0 %v57, 127
    %v93 = vpop.permute.xlu0 %92
    %v94 = vsel %vm77, %v91, %v93
    %v95 = vsel %vm77, %v93, %v91
    %v96 = vsel %vm62, %v94, 0.0
    %v97 = vsel %vm63, %v95, 0.0
    %v98 = vsub.f32 %v71, %v80
    %v99 = vsub.f32 %v72, %v81
    %v100 = vmul.f32 %v56, 2.0
    %v101 = vmul.f32 %v57, 2.0
    %v102 = vadd.f32 %v88, %v100
    %v103 = vadd.f32 %v89, %v101
    %v104 = vadd.f32 %v102, %v96
    %v105 = vadd.f32 %v103, %v97
    %v106 = vand.u32 2147483647, %v98
    %v107 = vand.u32 2147483647, %v99
    %v108 = vand.u32 2147483647, %v104
    %v109 = vand.u32 2147483647, %v105
    %v110 = vadd.f32 %v106, %v108
    %v111 = vadd.f32 %v107, %v109
    %112 = vst [vmem:[#allocation5] sm:$0xff] %v110
    %113 = vst [vmem:[#allocation5 + $0x8] sm:$0xff] %v111
    // Predicated region
    $region10: #{tpu_custom_call.1} parent=1 // pred_check
      _
    $region11: #{tpu_custom_call.1} parent=1 // pred_check_branch
      %115 = sbr.rel (0) target = $region13
    $region12: #{tpu_custom_call.1} parent=1 // pred_region
      %117 = vsyncadd [#allocation4], 0
      %s119 = sshll.u32 [#allocation5], 4
      %s120 = int_to_ptr.vmem [resolvable:$true] %s119
      %s121 = sshll.u32 %s1, 4
      %s122 = int_to_ptr.hbm [resolvable:$true] %s121
      %124 = dma.vmem_to_hbm [thread:$0]  %s120, 256, %s122, [#allocation4]
    $region13: #{tpu_custom_call.1} parent=1 // pred_fallthru
      _
    // Predicated region
    $region14: #{tpu_custom_call.1} parent=1 // pred_check
      _
    $region15: #{tpu_custom_call.1} parent=1 // pred_check_branch
      %126 = sbr.rel (0) target = $region17
    $region16: #{tpu_custom_call.1} parent=1 // pred_region
      %128 = dma.done [#allocation4], 256
    $region17: #{tpu_custom_call.1} parent=1 // pred_fallthru
      _
    %129 = vsyncpa [#allocation3], 1
    %130 = vsyncpa [#allocation4], 1

</llo_original>
